<compile_context>
chip_gen: v7x
topology: tpu7x:2x2x1
jax: 0.10.0
libtpu: 0.0.40
codegen_flags: <defaults>
</compile_context>

<pallas_src>
import functools
import math

import jax
import jax.numpy as jnp
from jax.experimental import pallas as pl
from jax.experimental.pallas import tpu as pltpu

EOS = 1e-10


def _round_up(x, m):
    return ((x + m - 1) // m) * m


# ----------------------------------------------------------------------------
# Kernel 1: per (row-tile i, K-tile k)
#   - accumulate f32 row sums of adj (exact degrees)
#   - re-emit the adj tile in bf16 for the matmul pass (fused cast)
#   - at k == last: inv = 1/(sqrt(deg+1)+EOS), z = inv * feat   (z stored in bf16)
# ----------------------------------------------------------------------------
def _prep_kernel(adj_ref, feat_ref, adj16_ref, inv_ref, z_ref, deg_ref):
    k = pl.program_id(1)

    a = adj_ref[...]                                     # (tm, tk) f32
    adj16_ref[...] = a.astype(jnp.bfloat16)              # fused f32 -> bf16 re-emit

    @pl.when(k == 0)
    def _():
        deg_ref[...] = jnp.zeros_like(deg_ref)

    deg_ref[...] += jnp.sum(a, axis=1, keepdims=True)    # exact f32 partial degrees

    @pl.when(k == pl.num_programs(1) - 1)
    def _():
        inv = 1.0 / (jnp.sqrt(deg_ref[...] + 1.0) + EOS)  # +1.0 = identity row-sum
        inv_ref[...] = inv
        z_ref[...] = (inv * feat_ref[...]).astype(jnp.bfloat16)


# ----------------------------------------------------------------------------
# Kernel 2: per (row-tile i, K-tile k)
#   acc += A_bf16[i,k] @ z_bf16[k]            (MXU, f32 accumulation)
#   at k == last: out = relu(scale * (feat - inv * (acc + inv*feat)))
# ----------------------------------------------------------------------------
def _filter_kernel(adj16_ref, z_ref, feat_ref, inv_ref, out_ref, acc_ref, *, scale):
    k = pl.program_id(1)

    @pl.when(k == 0)
    def _():
        acc_ref[...] = jnp.zeros_like(acc_ref)

    acc_ref[...] += jnp.dot(adj16_ref[...], z_ref[...],
                            preferred_element_type=jnp.float32)

    @pl.when(k == pl.num_programs(1) - 1)
    def _():
        inv = inv_ref[...]                                # (tm, 1)  f32
        feat = feat_ref[...]                              # (tm, fp) f32
        y = acc_ref[...] + inv * feat                     # A @ z  +  z_rows (identity term)
        out_ref[...] = jnp.maximum(scale * (feat - inv * y), 0.0)


# ----------------------------------------------------------------------------
# Wrapper: decoupled row/column padding, 2-D grid, VMEM-bounded K tiling.
# ----------------------------------------------------------------------------
def dc_filter_apply(scale, adj, feat, *, tile_rows=256, tile_k=2048):
    n = adj.shape[0]
    f = feat.shape[1]

    fp = _round_up(f, 128)                    # lane-dense (unmasked) output stores
    tm = min(tile_rows, _round_up(n, 8))      # row tile (sublane-aligned)
    nr = _round_up(n, tm)                     # rows padded only to whole row tiles
    nc0 = _round_up(n, 128)                   # columns (K) need only 128-lane alignment
    tk = min(tile_k, nc0)                     # K tile (multiple of 128)
    nc = _round_up(nc0, tk)

    adj_p = jnp.pad(adj.astype(jnp.float32), ((0, nr - n), (0, nc - n)))
    feat_p = jnp.pad(feat.astype(jnp.float32), ((0, nr - n), (0, fp - f)))

    # VMEM: double-buffered tiles per operand + f32 accumulator, headroom, capped below
    # physical capacity (v7x has only 64 MiB per TensorCore).
    vmem_k1 = 2 * (tm * tk * 4 + tm * tk * 2 + tm * fp * 4 + tm * fp * 2 + tm * 4) + tm * 4
    vmem_k2 = 2 * (tm * tk * 2 + tk * fp * 2 + tm * fp * 4 + tm * 4 + tm * fp * 4) + tm * fp * 4
    need = max(vmem_k1, vmem_k2) + (4 << 20)
    try:
        cap = int(pltpu.get_tpu_info().vmem_capacity_bytes * 0.8)
    except Exception:  # conservative fallback valid on every TPU generation
        cap = 48 << 20
    params = pltpu.CompilerParams(
        dimension_semantics=("parallel", "arbitrary"),   # rows shard across cores, K reduces
        vmem_limit_bytes=int(min(max(need, 16 << 20), cap)),
    )

    grid = (nr // tm, nc // tk)

    adj16, inv, z = pl.pallas_call(
        _prep_kernel,
        out_shape=(jax.ShapeDtypeStruct((nr, nc), jnp.bfloat16),
                   jax.ShapeDtypeStruct((nr, 1), jnp.float32),
                   jax.ShapeDtypeStruct((nr, fp), jnp.bfloat16)),
        grid=grid,
        in_specs=[pl.BlockSpec((tm, tk), lambda i, k: (i, k)),    # adj tile (f32, exact degrees)
                  pl.BlockSpec((tm, fp), lambda i, k: (i, 0))],   # feat rows (resident over k)
        out_specs=[pl.BlockSpec((tm, tk), lambda i, k: (i, k)),   # bf16 adj stream
                   pl.BlockSpec((tm, 1), lambda i, k: (i, 0)),    # inv rows
                   pl.BlockSpec((tm, fp), lambda i, k: (i, 0))],  # z rows (bf16)
        scratch_shapes=[pltpu.VMEM((tm, 1), jnp.float32)],        # degree accumulator
        compiler_params=params,
        cost_estimate=pl.CostEstimate(
            flops=nr * nc + 3 * nr * fp,
            transcendentals=2 * nr,
            bytes_accessed=6 * nr * nc + 6 * nr * fp + 4 * nr),
    )(adj_p, feat_p)

    # z is consumed along the contraction (column) axis of adj; match its row padding.
    if nc == nr:
        z_cols = z
    elif nc < nr:
        z_cols = z[:nc]
    else:
        z_cols = jnp.pad(z, ((0, nc - nr), (0, 0)))

    out_p = pl.pallas_call(
        functools.partial(_filter_kernel, scale=float(scale)),
        out_shape=jax.ShapeDtypeStruct((nr, fp), jnp.float32),
        grid=grid,
        in_specs=[pl.BlockSpec((tm, tk), lambda i, k: (i, k)),    # adj tile (bf16)
                  pl.BlockSpec((tk, fp), lambda i, k: (k, 0)),    # z K-slab (bf16)
                  pl.BlockSpec((tm, fp), lambda i, k: (i, 0)),    # feat rows (epilogue only)
                  pl.BlockSpec((tm, 1), lambda i, k: (i, 0))],    # inv rows (epilogue only)
        out_specs=pl.BlockSpec((tm, fp), lambda i, k: (i, 0)),
        scratch_shapes=[pltpu.VMEM((tm, fp), jnp.float32)],       # f32 matmul accumulator
        compiler_params=params,
        cost_estimate=pl.CostEstimate(
            flops=2 * nr * nc * fp + 6 * nr * fp,
            transcendentals=0,
            bytes_accessed=2 * nr * nc + 2 * (nr // tm) * nc * fp + 12 * nr * fp + 4 * nr),
    )(adj16, z_cols, feat_p, inv)

    return out_p[:n, :f]


# ----------------------------------------------------------------------------
# Glue: closed-form replacement for compute_coeff (sympy/scipy-free)
# ----------------------------------------------------------------------------
def compute_coeff(d):
    """thetas[i][j] = coeff of x^j in (x/2)^i (1-x/2)^(d-i) / Beta(i+1, d+1-i)."""
    thetas = []
    for i in range(d + 1):
        inv_beta = math.factorial(d + 1) / (math.factorial(i) * math.factorial(d - i))
        coeffs = [0.0] * (d + 1)
        for m in range(d - i + 1):
            coeffs[i + m] = math.comb(d - i, m) * ((-0.5) ** m) * (0.5 ** i) * inv_beta
        thetas.append(coeffs)
    return thetas


def select_filter_scales(coeff_degree, flag):
    # generate_beta_filters collapses to filters[i] = (sum_{j>=1} thetas[i][j]) * Laplacian,
    # so each filter is fully described by a single scalar scale.
    thetas = compute_coeff(coeff_degree)
    scales = [float(sum(t[1:])) for t in thetas]
    d = len(scales)
    index = int((d + 1) / 2)
    return scales[0:index] if flag == 1 else scales[index:d + 1]


# ----------------------------------------------------------------------------
# DC_layer forward (mirrors the PyTorch control flow / return value)
# ----------------------------------------------------------------------------
def dc_layer_forward(edges, feat, weighted_adj, coeff_degree, flag, n_layers, nnodes):
    # get_adj_from_edges: dense scatter of edge weights (plain JAX glue outside the kernels)
    src, dst = edges
    adj = jnp.zeros((nnodes, nnodes), jnp.float32).at[src, dst].set(weighted_adj)

    sel = select_filter_scales(coeff_degree, flag)
    k = len(sel)
    if n_layers < 1 or k < 2:
        # Mirrors the reference, where `x` would be unbound and forward would fail.
        raise ValueError("DC_layer forward produces no output for this configuration")

    # The reference loops over n_layers and filters but overwrites `x` every iteration and
    # always reads the original `feat`, so the returned value is exactly the result of the
    # LAST selected filter; one fused kernel launch suffices.
    return dc_filter_apply(sel[k - 1], adj, feat)


# ----------------------------------------------------------------------------
# Pure-JAX f32 reference (for a loose-tolerance sanity check of the bf16 MXU path)
# ----------------------------------------------------------------------------
def _reference_forward(scale, adj, feat):
    n = adj.shape[0]
    a = adj + jnp.eye(n, dtype=jnp.float32)
    inv = 1.0 / (jnp.sqrt(a.sum(axis=1)) + EOS)
    lap = jnp.eye(n, dtype=jnp.float32) - inv[:, None] * a * inv[None, :]
    return jnp.maximum(scale * (lap @ feat), 0.0)


# ----------------------------------------------------------------------------
if __name__ == "__main__":
    key = jax.random.PRNGKey(0)
    k_src, k_dst, k_w, k_feat = jax.random.split(key, 4)

    nnodes = 16
    in_dim = 32
    n_edges = 48
    coeff_degree = 3   # -> 4 filters, 2 LP + 2 HP
    n_layers = 2
    flag = 1           # low-pass branch

    src = jax.random.randint(k_src, (n_edges,), 0, nnodes)
    dst = jax.random.randint(k_dst, (n_edges,), 0, nnodes)
    weighted_adj = jax.random.uniform(k_w, (n_edges,), jnp.float32)
    feat = jax.random.normal(k_feat, (nnodes, in_dim), jnp.float32)

    out = dc_layer_forward((src, dst), feat, weighted_adj,
                           coeff_degree, flag, n_layers, nnodes)
    out = jax.block_until_ready(out)

    # sanity check against the exact f32 reference (bf16 matmul -> loose tolerance)
    adj = jnp.zeros((nnodes, nnodes), jnp.float32).at[src, dst].set(weighted_adj)
    scale = select_filter_scales(coeff_degree, flag)[-1]
    ref = _reference_forward(scale, adj, feat)

    assert out.shape == (nnodes, in_dim)
    assert bool(jnp.all(out >= 0.0))                      # ReLU output
    max_err = float(jnp.max(jnp.abs(out - ref)))
    assert max_err < 0.2, f"max abs error {max_err}"
    print("KERNEL_OK")
</pallas_src>

<mosaic_0001>
module attributes {stable_mosaic.version = 11 : i64} {
  func.func @_prep_kernel(%arg0: i32, %arg1: i32, %arg2: memref<16x128xf32, #tpu.memory_space<vmem>>, %arg3: memref<16x128xf32, #tpu.memory_space<vmem>>, %arg4: memref<16x128xbf16, #tpu.memory_space<vmem>>, %arg5: memref<16x1xf32, #tpu.memory_space<vmem>>, %arg6: memref<16x128xbf16, #tpu.memory_space<vmem>>, %arg7: memref<16x1xf32, #tpu.memory_space<vmem>>) attributes {dimension_semantics = [#tpu.dimension_semantics<parallel>, #tpu.dimension_semantics<arbitrary>], iteration_bounds = array<i64: 1, 1>, scalar_prefetch = 0 : i64, scratch_operands = 1 : i64, tpu.core_type = #tpu.core_type<tc>, window_params = [{transform_indices = @transform_0, window_bounds = array<i64: 16, 128>}, {transform_indices = @transform_1, window_bounds = array<i64: 16, 128>}, {transform_indices = @transform_2, window_bounds = array<i64: 16, 128>}, {transform_indices = @transform_3, window_bounds = array<i64: 16, 1>}, {transform_indices = @transform_4, window_bounds = array<i64: 16, 128>}]} {
    %c0 = arith.constant 0 : index
    %c0_0 = arith.constant 0 : index
    %0 = vector.load %arg2[%c0, %c0_0] : memref<16x128xf32, #tpu.memory_space<vmem>>, vector<16x128xf32>
    %1 = arith.truncf %0 : vector<16x128xf32> to vector<16x128xbf16>
    %c0_1 = arith.constant 0 : index
    %c0_2 = arith.constant 0 : index
    %2 = vector.load %arg4[%c0_1, %c0_2] : memref<16x128xbf16, #tpu.memory_space<vmem>>, vector<16x128xbf16>
    tpu.vector_store %arg4[%c0_1, %c0_2], %1 {strides = array<i32>} : memref<16x128xbf16, #tpu.memory_space<vmem>>, vector<16x128xbf16>,
    %c0_i32 = arith.constant 0 : i32
    %3 = arith.cmpi eq, %arg1, %c0_i32 : i32
    %4 = arith.extui %3 : i1 to i32
    %c0_i32_3 = arith.constant 0 : i32
    %5 = arith.cmpi ne, %4, %c0_i32_3 : i32
    scf.if %5 {
      %cst_10 = arith.constant 0.000000e+00 : f32
      %14 = vector.broadcast %cst_10 : f32 to vector<16x1xf32>
      %c0_11 = arith.constant 0 : index
      %c0_12 = arith.constant 0 : index
      %15 = vector.load %arg7[%c0_11, %c0_12] : memref<16x1xf32, #tpu.memory_space<vmem>>, vector<16x1xf32>
      tpu.vector_store %arg7[%c0_11, %c0_12], %14 {strides = array<i32>} : memref<16x1xf32, #tpu.memory_space<vmem>>, vector<16x1xf32>,
    } else {
    }
    %c0_4 = arith.constant 0 : index
    %c0_5 = arith.constant 0 : index
    %6 = vector.load %arg7[%c0_4, %c0_5] : memref<16x1xf32, #tpu.memory_space<vmem>>, vector<16x1xf32>
    %cst = arith.constant dense<0.000000e+00> : vector<16xf32>
    %7 = vector.multi_reduction <add>, %0, %cst [1] : vector<16x128xf32> to vector<16xf32>
    %8 = vector.shape_cast %7 : vector<16xf32> to vector<16x1xf32>
    %9 = arith.addf %6, %8 : vector<16x1xf32>
    %c0_6 = arith.constant 0 : index
    %c0_7 = arith.constant 0 : index
    %10 = vector.load %arg7[%c0_6, %c0_7] : memref<16x1xf32, #tpu.memory_space<vmem>>, vector<16x1xf32>
    tpu.vector_store %arg7[%c0_6, %c0_7], %9 {strides = array<i32>} : memref<16x1xf32, #tpu.memory_space<vmem>>, vector<16x1xf32>,
    %c0_i32_8 = arith.constant 0 : i32
    %11 = arith.cmpi eq, %arg1, %c0_i32_8 : i32
    %12 = arith.extui %11 : i1 to i32
    %c0_i32_9 = arith.constant 0 : i32
    %13 = arith.cmpi ne, %12, %c0_i32_9 : i32
    scf.if %13 {
      %c0_10 = arith.constant 0 : index
      %c0_11 = arith.constant 0 : index
      %14 = vector.load %arg7[%c0_10, %c0_11] : memref<16x1xf32, #tpu.memory_space<vmem>>, vector<16x1xf32>
      %cst_12 = arith.constant 1.000000e+00 : f32
      %15 = vector.broadcast %cst_12 : f32 to vector<16x1xf32>
      %16 = arith.addf %14, %15 : vector<16x1xf32>
      %17 = math.sqrt %16 : vector<16x1xf32>
      %cst_13 = arith.constant 1.000000e-10 : f32
      %18 = vector.broadcast %cst_13 : f32 to vector<16x1xf32>
      %19 = arith.addf %17, %18 : vector<16x1xf32>
      %cst_14 = arith.constant 1.000000e+00 : f32
      %20 = vector.broadcast %cst_14 : f32 to vector<16x1xf32>
      %21 = arith.divf %20, %19 : vector<16x1xf32>
      %c0_15 = arith.constant 0 : index
      %c0_16 = arith.constant 0 : index
      %22 = vector.load %arg5[%c0_15, %c0_16] : memref<16x1xf32, #tpu.memory_space<vmem>>, vector<16x1xf32>
      tpu.vector_store %arg5[%c0_15, %c0_16], %21 {strides = array<i32>} : memref<16x1xf32, #tpu.memory_space<vmem>>, vector<16x1xf32>,
      %c0_17 = arith.constant 0 : index
      %c0_18 = arith.constant 0 : index
      %23 = vector.load %arg3[%c0_17, %c0_18] : memref<16x128xf32, #tpu.memory_space<vmem>>, vector<16x128xf32>
      %24 = vector.broadcast %21 : vector<16x1xf32> to vector<16x128xf32>
      %25 = arith.mulf %24, %23 : vector<16x128xf32>
      %26 = arith.truncf %25 : vector<16x128xf32> to vector<16x128xbf16>
      %c0_19 = arith.constant 0 : index
      %c0_20 = arith.constant 0 : index
      %27 = vector.load %arg6[%c0_19, %c0_20] : memref<16x128xbf16, #tpu.memory_space<vmem>>, vector<16x128xbf16>
      tpu.vector_store %arg6[%c0_19, %c0_20], %26 {strides = array<i32>} : memref<16x128xbf16, #tpu.memory_space<vmem>>, vector<16x128xbf16>,
    } else {
    }
    return
  }
  func.func @transform_0(%arg0: i32, %arg1: i32) -> (i32, i32) {
    %c0_i32 = arith.constant 0 : i32
    return %arg0, %arg1 : i32, i32
  }
  func.func @transform_1(%arg0: i32, %arg1: i32) -> (i32, i32) {
    %c0_i32 = arith.constant 0 : i32
    %c0_i32_0 = arith.constant 0 : i32
    return %arg0, %c0_i32 : i32, i32
  }
  func.func @transform_2(%arg0: i32, %arg1: i32) -> (i32, i32) {
    %c0_i32 = arith.constant 0 : i32
    return %arg0, %arg1 : i32, i32
  }
  func.func @transform_3(%arg0: i32, %arg1: i32) -> (i32, i32) {
    %c0_i32 = arith.constant 0 : i32
    %c0_i32_0 = arith.constant 0 : i32
    return %arg0, %c0_i32 : i32, i32
  }
  func.func @transform_4(%arg0: i32, %arg1: i32) -> (i32, i32) {
    %c0_i32 = arith.constant 0 : i32
    %c0_i32_0 = arith.constant 0 : i32
    return %arg0, %c0_i32 : i32, i32
  }
}

</mosaic_0001>

<llo_original>
// kernel: tpu_custom_call.1
$region0: #{tpu_custom_call.1}
  #allocation0 [shape = 'u32[]', space=smem, size = 0x4, offset = 0x4, fixed_abs, tag = 'smem constant byte address 0x4 - core index']
  #allocation1 [shape = 'u32[144,128]{1,0:T(1,128)}', space=vmem, size = 0x12000, scoped, tag = 'internal scratch']
  #allocation2 [shape = 'f32[16,1]{1,0:T(8,128)}', space=vmem, size = 0x2000, scoped, tag = 'scratch operand']
  %s0 = inlined_call_operand.hbm [shape: f32[16,128], index: 0, kind: input, shape index: {}]
  %s1 = inlined_call_operand.hbm [shape: f32[16,128], index: 1, kind: input, shape index: {}]
  %s2 = inlined_call_operand.hbm [shape: bf16[16,128], index: 2, kind: output, shape index: {0}]
  %s3 = inlined_call_operand.vmem [shape: f32[16,1], index: 3, kind: output, shape index: {1}]
  %s4 = inlined_call_operand.hbm [shape: bf16[16,128], index: 4, kind: output, shape index: {2}]
  %5 = xla_tuple %s2, %s3, %s4
  %s6 = sld [smem:[#allocation0]]
  $region50: #{tpu_custom_call.1} parent=0
    _
  %s8 = ssub.s32 1, %s6
  %s9 = scalar_select 0, %s8, %s6
  $region1: #{tpu_custom_call.1} parent=0
    #allocation3 [shape = 'u8[8192]{0}', space=vmem, size = 0x2000, scoped, tag = 'input window, operand 0, single buffered']
    #allocation4 [shape = 's32[1]{0}', space=sflag, size = 0x4, scoped, tag = 'scoped memory for tpu_custom_call.1']
    #allocation5 [shape = 's32[1]{0}', space=sflag, size = 0x4, scoped, tag = 'scoped memory for tpu_custom_call.1']
    #allocation6 [shape = 'u8[8192]{0}', space=vmem, size = 0x2000, scoped, tag = 'input window, operand 1, single buffered']
    #allocation7 [shape = 's32[1]{0}', space=sflag, size = 0x4, scoped, tag = 'scoped memory for tpu_custom_call.1']
    #allocation8 [shape = 'u8[4096]{0}', space=vmem, size = 0x1000, scoped, tag = 'output window, operand 0, single buffered']
    #allocation9 [shape = 'u8[4096]{0}', space=vmem, size = 0x1000, scoped, tag = 'output window, operand 2, single buffered']
    #allocation10 [shape = 's32[1]{0}', space=sflag, size = 0x4, scoped, tag = 'scoped memory for tpu_custom_call.1']
    %10 = vsyncpa [#allocation4], 0
    %11 = vsyncpa [#allocation7], 0
    %12 = vsyncpa [#allocation5], 0
    %13 = vsyncpa [#allocation10], 0
    // Predicated region
    $region2: #{tpu_custom_call.1} parent=1 // pred_check
      _
    $region3: #{tpu_custom_call.1} parent=1 // pred_check_branch
      %15 = sbr.rel (0) target = $region5
    $region4: #{tpu_custom_call.1} parent=1 // pred_region
      %s17 = ssub.s32 256, 256
      %18 = vsyncadd [#allocation4], %s17
      %s19 = sshll.u32 [#allocation3], 4
      %s20 = int_to_ptr.vmem [resolvable:$true] %s19
      %25 = dma.hbm_to_vmem [thread:$0]  %s0, 256, %s20, [#allocation4], 128, 128, 8
    $region5: #{tpu_custom_call.1} parent=1 // pred_fallthru
      _
    // Predicated region
    $region6: #{tpu_custom_call.1} parent=1 // pred_check
      _
    $region7: #{tpu_custom_call.1} parent=1 // pred_check_branch
      %27 = sbr.rel (0) target = $region9
    $region8: #{tpu_custom_call.1} parent=1 // pred_region
      %s29 = ssub.s32 256, 256
      %30 = vsyncadd [#allocation7], %s29
      %s31 = sshll.u32 [#allocation6], 4
      %s32 = int_to_ptr.vmem [resolvable:$true] %s31
      %37 = dma.hbm_to_vmem [thread:$0]  %s1, 256, %s32, [#allocation7], 128, 128, 8
    $region9: #{tpu_custom_call.1} parent=1 // pred_fallthru
      _
    // Predicated region
    $region10: #{tpu_custom_call.1} parent=1 // pred_check
      _
    $region11: #{tpu_custom_call.1} parent=1 // pred_check_branch
      %39 = sbr.rel (0) target = $region13
    $region12: #{tpu_custom_call.1} parent=1 // pred_region
      %40 = dma.done [#allocation4], 256
    $region13: #{tpu_custom_call.1} parent=1 // pred_fallthru
      _
    // Predicated region
    $region14: #{tpu_custom_call.1} parent=1 // pred_check
      _
    $region15: #{tpu_custom_call.1} parent=1 // pred_check_branch
      %42 = sbr.rel (0) target = $region17
    $region16: #{tpu_custom_call.1} parent=1 // pred_region
      %43 = dma.done [#allocation7], 256
    $region17: #{tpu_custom_call.1} parent=1 // pred_fallthru
      _
    %v44 = vld [vmem:[#allocation3] sm:$0xff]
    %v45 = vld [vmem:[#allocation3 + $0x8] sm:$0xff]
    %v46 = vpack.c.bf16 %v45, %v44
    %v48 = vunpack.c.l.b16 %v46
    %v49 = vunpack.c.h.b16 %v46
    %v50 = vpack.c.b16 %v48, %v48
    %v51 = vpack.c.b16 %v49, %v49
    %54 = vst [vmem:[#allocation8] sm:$0xf] %v50
    %55 = vst [vmem:[#allocation8 + $0x4] sm:$0xf] %v51
    %p56 = scmp.eq.s32.totalorder 0, 0
    // Predicated region
    $region18: #{tpu_custom_call.1} parent=1 // pred_check
      %p57 = pneg %p56
    $region19: #{tpu_custom_call.1} parent=1 // pred_check_branch
      %59 = sbr.rel (%p57) target = $region21
    $region20: #{tpu_custom_call.1} parent=1 // pred_region
      %vm60 = vcmask 7168
      %61 = vst.msk [vmem:[#allocation2] sm:$0xff] %vm60, 0.0
      %62 = vst.msk [vmem:[#allocation2 + $0x8] sm:$0xff] %vm60, 0.0
    $region21: #{tpu_custom_call.1} parent=1 // pred_fallthru
      _
    %v63 = vld [vmem:[#allocation2] sm:$0xff]
    %v64 = vld [vmem:[#allocation2 + $0x8] sm:$0xff]
    %65 = vadd.xlane.f32.xlu0 %v44
    %v66 = vpop.xlane.xlu0 %65
    %67 = vadd.xlane.f32.xlu0 %v45
    %v68 = vpop.xlane.xlu0 %67
    %v69 = vadd.f32 %v63, %v66
    %v70 = vadd.f32 %v64, %v68
    %vm71 = vcmask 7168
    %72 = vst.msk [vmem:[#allocation2] sm:$0xff] %vm71, %v69
    %73 = vst.msk [vmem:[#allocation2 + $0x8] sm:$0xff] %vm71, %v70
    // Predicated region
    $region22: #{tpu_custom_call.1} parent=1 // pred_check
      %p74 = pneg %p56
    $region23: #{tpu_custom_call.1} parent=1 // pred_check_branch
      %76 = sbr.rel (%p74) target = $region25
    $region24: #{tpu_custom_call.1} parent=1 // pred_region
      %v77 = vld [vmem:[#allocation2] sm:$0xff]
      %v78 = vld [vmem:[#allocation2 + $0x8] sm:$0xff]
      %v79 = vadd.f32 %v77, 1.0
      %v80 = vadd.f32 %v78, 1.0
      %v81 = vrsqrt.pop %v79
      %v82 = vmul.f32 %v79, %v81
      %vm83 = vcmp.eq.f32.partialorder %v79, inf
      %v84 = vsel %vm83, %v79, %v82
      %vm85 = vcmp.eq.f32.partialorder %v79, 0.0
      %v86 = vand.u32 %v79, 2147483648
      %v87 = vsel %vm85, %v86, %v84
      %v88 = vrsqrt.pop %v80
      %v89 = vmul.f32 %v80, %v88
      %vm90 = vcmp.eq.f32.partialorder %v80, inf
      %v91 = vsel %vm90, %v80, %v89
      %vm92 = vcmp.eq.f32.partialorder %v80, 0.0
      %v93 = vand.u32 %v80, 2147483648
      %v94 = vsel %vm92, %v93, %v91
      %v95 = vadd.f32 %v87, 1e-10
      %v96 = vadd.f32 %v94, 1e-10
      %v97 = vrcp.pop %v95
      %v98 = vmul.f32 1.0, %v97
      %v99 = vrcp.pop %v96
      %v100 = vmul.f32 1.0, %v99
      %101 = vst.msk [vmem:[%s3] sm:$0xff] %vm71, %v98
      %102 = vst.msk [vmem:[%s3 + $0x8] sm:$0xff] %vm71, %v100
      %v103 = vld [vmem:[#allocation6] sm:$0xff]
      %v104 = vld [vmem:[#allocation6 + $0x8] sm:$0xff]
      %106 = vset.pattern.permute.xlu0 0
      %107 = vperm.xlu0 %106, %v98
      %v108 = vpop.permute.xlu0 %107
      %111 = vset.pattern.permute.xlu0 0
      %112 = vperm.xlu0 %111, %v100
      %v113 = vpop.permute.xlu0 %112
      %v115 = vmul.f32 %v108, %v103
      %v116 = vmul.f32 %v113, %v104
      %v117 = vpack.c.bf16 %v116, %v115
      %v119 = vunpack.c.l.b16 %v117
      %v120 = vunpack.c.h.b16 %v117
      %v121 = vpack.c.b16 %v119, %v119
      %v122 = vpack.c.b16 %v120, %v120
      %125 = vst [vmem:[#allocation9] sm:$0xf] %v121
      %126 = vst [vmem:[#allocation9 + $0x4] sm:$0xf] %v122
    $region25: #{tpu_custom_call.1} parent=1 // pred_fallthru
      _
    // Predicated region
    $region26: #{tpu_custom_call.1} parent=1 // pred_check
      _
    $region27: #{tpu_custom_call.1} parent=1 // pred_check_branch
      %128 = sbr.rel (0) target = $region29
    $region28: #{tpu_custom_call.1} parent=1 // pred_region
      %s130 = ssub.s32 128, 128
      %131 = vsyncadd [#allocation5], %s130
      %s132 = sshll.u32 [#allocation8], 4
      %s133 = int_to_ptr.vmem [resolvable:$true] %s132
      %138 = dma.vmem_to_hbm [thread:$0]  %s133, 128, %s2, [#allocation5], 64, 64, 4
    $region29: #{tpu_custom_call.1} parent=1 // pred_fallthru
      _
    // Predicated region
    $region30: #{tpu_custom_call.1} parent=1 // pred_check
      _
    $region31: #{tpu_custom_call.1} parent=1 // pred_check_branch
      %140 = sbr.rel (0) target = $region33
    $region32: #{tpu_custom_call.1} parent=1 // pred_region
      _
    $region33: #{tpu_custom_call.1} parent=1 // pred_fallthru
      _
    // Predicated region
    $region34: #{tpu_custom_call.1} parent=1 // pred_check
      _
    $region35: #{tpu_custom_call.1} parent=1 // pred_check_branch
      %142 = sbr.rel (0) target = $region37
    $region36: #{tpu_custom_call.1} parent=1 // pred_region
      %s144 = ssub.s32 128, 128
      %145 = vsyncadd [#allocation10], %s144
      %s146 = sshll.u32 [#allocation9], 4
      %s147 = int_to_ptr.vmem [resolvable:$true] %s146
      %152 = dma.vmem_to_hbm [thread:$0]  %s147, 128, %s4, [#allocation10], 64, 64, 4
    $region37: #{tpu_custom_call.1} parent=1 // pred_fallthru
      _
    // Predicated region
    $region38: #{tpu_custom_call.1} parent=1 // pred_check
      _
    $region39: #{tpu_custom_call.1} parent=1 // pred_check_branch
      %154 = sbr.rel (0) target = $region41
    $region40: #{tpu_custom_call.1} parent=1 // pred_region
      %155 = dma.done [#allocation5], 128
    $region41: #{tpu_custom_call.1} parent=1 // pred_fallthru
      _
    // Predicated region
    $region42: #{tpu_custom_call.1} parent=1 // pred_check
      _
    $region43: #{tpu_custom_call.1} parent=1 // pred_check_branch
      %157 = sbr.rel (0) target = $region45
    $region44: #{tpu_custom_call.1} parent=1 // pred_region
      _
    $region45: #{tpu_custom_call.1} parent=1 // pred_fallthru
      _
    // Predicated region
    $region46: #{tpu_custom_call.1} parent=1 // pred_check
      _
    $region47: #{tpu_custom_call.1} parent=1 // pred_check_branch
      %159 = sbr.rel (0) target = $region49
    $region48: #{tpu_custom_call.1} parent=1 // pred_region
      %160 = dma.done [#allocation10], 128
    $region49: #{tpu_custom_call.1} parent=1 // pred_fallthru
      _
    %161 = vsyncpa [#allocation4], 1
    %162 = vsyncpa [#allocation7], 1
    %163 = vsyncpa [#allocation5], 1
    %164 = vsyncpa [#allocation10], 1

</llo_original>
